<compile_context>
chip_gen: v5e
topology: v5e:2x2
jax: 0.10.0
libtpu: 0.0.40
codegen_flags: <defaults>
</compile_context>

<pallas_src>
import functools

import jax
import jax.numpy as jnp
from jax import lax
from jax.experimental import pallas as pl
from jax.experimental.pallas import tpu as pltpu


# ---------------------------------------------------------------------------
# Kernel A: phase cumsum -> sawtooth -> impulse train (fully parallel grid)
# ---------------------------------------------------------------------------
def _impulse_kernel(f0_ref, off_ref, wrap_ref, triu_ref, imp_ref, *, inv_sr):
    x = f0_ref[...] * (-inv_sr)                       # (A, 128) f32 phase increments
    # hi/lo bf16 split: x_hi and the 0/1 triangle are bf16-exact, so the two MXU matmuls
    # reproduce the f32 cumsum up to f32 accumulation error (no bf16 precision loss).
    x_hi = x.astype(jnp.bfloat16)
    x_lo = (x - x_hi.astype(jnp.float32)).astype(jnp.bfloat16)
    tri = triu_ref[...]                               # (128, 128) bf16, tri[j, i] = (j <= i)
    c = (jnp.dot(x_hi, tri, preferred_element_type=jnp.float32)
         + jnp.dot(x_lo, tri, preferred_element_type=jnp.float32))   # within-row cumsum
    rad = off_ref[...] + c                            # (A, 1) row phase offset + (A, 128)
    saw = rad - jnp.floor(rad)                        # torch: rad % 1.0

    # previous-sample sawtooth via the exact cumsum relation rad[t-1] = rad[t] - x[t];
    # no lane shift / carried state needed.
    prev_rad = rad - x
    prev_saw = prev_rad - jnp.floor(prev_rad)

    # global t == 0 uses the circular-roll wrap value sawtooth[L-1].
    row = lax.broadcasted_iota(jnp.int32, x.shape, 0)
    lane = lax.broadcasted_iota(jnp.int32, x.shape, 1)
    first = jnp.logical_and(pl.program_id(1) == 0,
                            jnp.logical_and(row == 0, lane == 0))
    prev_saw = jnp.where(first, wrap_ref[...], prev_saw)

    imp_ref[...] = saw - prev_saw


def _impulse_pallas(f0_t, off_t, wrap_t, triu, *, sample_rate, tile_rows):
    N, R_in, _ = f0_t.shape
    kern = functools.partial(_impulse_kernel, inv_sr=1.0 / float(sample_rate))
    return pl.pallas_call(
        kern,
        out_shape=jax.ShapeDtypeStruct((N, R_in, 128), jnp.float32),
        grid=(N, R_in // tile_rows),
        in_specs=[
            pl.BlockSpec((None, tile_rows, 128), lambda b, r: (b, r, 0)),  # f0 tile
            pl.BlockSpec((None, tile_rows, 1), lambda b, r: (b, r, 0)),    # row phase offsets
            pl.BlockSpec((None, 1, 128), lambda b, r: (b, 0, 0)),          # wrap (per batch)
            pl.BlockSpec((128, 128), lambda b, r: (0, 0)),                 # triangle (resident)
        ],
        out_specs=pl.BlockSpec((None, tile_rows, 128), lambda b, r: (b, r, 0)),
        compiler_params=pltpu.CompilerParams(
            dimension_semantics=("parallel", "parallel")),
    )(f0_t, off_t, wrap_t, triu)


# ---------------------------------------------------------------------------
# Kernel B: banded FIR conv (bf16 MXU, f32 accumulation) + voiced/unvoiced mix
# ---------------------------------------------------------------------------
def _conv_mix_kernel(f0_ref, noise_ref, imp_ref, smat_ref, out_ref, *,
                     min_frequency, tile_rows, num_shifts):
    t = pl.program_id(1)
    base = pl.multiple_of(t * tile_rows, tile_rows)
    acc = jnp.zeros((tile_rows, 128), jnp.float32)
    for d in range(num_shifts):                        # static, small: ceil((K-1)/128)+1
        win = imp_ref[pl.ds(base + d, tile_rows), :]   # (tile_rows, 128) impulse window
        acc = acc + jnp.dot(win.astype(jnp.bfloat16), smat_ref[d],
                            preferred_element_type=jnp.float32)
    out_ref[...] = jnp.where(f0_ref[...] >= min_frequency, acc, noise_ref[...])


def _conv_mix_pallas(f0_t, noise_t, imp_t, smat, *, min_frequency, tile_rows, out_rows):
    N, R_in, _ = imp_t.shape
    D = smat.shape[0]
    kern = functools.partial(_conv_mix_kernel, min_frequency=float(min_frequency),
                             tile_rows=tile_rows, num_shifts=D)
    # TODO(synk): for very long sequences, window the per-batch impulse input (banded
    # BlockSpec over an extra shift axis) so the resident VMEM block is O(tile), not O(L).
    return pl.pallas_call(
        kern,
        out_shape=jax.ShapeDtypeStruct((N, out_rows, 128), jnp.float32),
        grid=(N, out_rows // tile_rows),
        in_specs=[
            pl.BlockSpec((None, tile_rows, 128), lambda b, t: (b, t, 0)),  # f0 tile
            pl.BlockSpec((None, tile_rows, 128), lambda b, t: (b, t, 0)),  # noise tile
            pl.BlockSpec((None, R_in, 128), lambda b, t: (b, 0, 0)),       # impulse (per batch)
            pl.BlockSpec((D, 128, 128), lambda b, t: (0, 0, 0)),           # FIR shift mats
        ],
        out_specs=pl.BlockSpec((None, tile_rows, 128), lambda b, t: (b, t, 0)),
        compiler_params=pltpu.CompilerParams(
            dimension_semantics=("parallel", "parallel")),
    )(f0_t, noise_t, imp_t, smat)


# ---------------------------------------------------------------------------
# Wrapper: tiling / padding / structural matrices, then the two kernels
# ---------------------------------------------------------------------------
def _build_shift_mats(taps, num_shifts):
    """S[d, lw, lo] = taps[d*128 + lw - lo] if 0 <= d*128+lw-lo < K else 0 (bf16)."""
    K = taps.shape[0]
    d = jnp.arange(num_shifts, dtype=jnp.int32)[:, None, None]
    lw = jnp.arange(128, dtype=jnp.int32)[None, :, None]
    lo = jnp.arange(128, dtype=jnp.int32)[None, None, :]
    k = d * 128 + lw - lo
    valid = (k >= 0) & (k < K)
    return jnp.where(valid, taps[jnp.clip(k, 0, K - 1)], 0.0).astype(jnp.bfloat16)


def cyclic_noise_source(f0_up, noise, taps, *, sample_rate, min_frequency,
                        imp_tile_rows=8, conv_tile_rows=8):
    """f0_up, noise: (N, L) f32; taps: (K,) f32.  Returns (source (N, L), impulse (N, L_in))."""
    f0_up = f0_up.astype(jnp.float32)
    noise = noise.astype(jnp.float32)
    taps = taps.astype(jnp.float32)
    N, L = f0_up.shape
    K = taps.shape[0]
    D = (K + 126) // 128 + 1                          # shifted 128-blocks spanned by the FIR
    rows_l = pl.cdiv(L, 128)
    R_out = pl.cdiv(rows_l, conv_tile_rows) * conv_tile_rows
    R_need = R_out + (D - 1)                          # forward-looking conv lookahead rows
    R_in = pl.cdiv(R_need, imp_tile_rows) * imp_tile_rows
    L_in = R_in * 128

    f0_t = jnp.pad(f0_up, ((0, 0), (0, L_in - L))).reshape(N, R_in, 128)
    noise_t = jnp.pad(noise, ((0, 0), (0, L_in - L))).reshape(N, R_in, 128)

    # Cross-row phase prefix (exclusive cumsum of per-row totals) and circular wrap value
    # sawtooth[L-1]; tiny (N, R_in)-sized XLA ops, makes kernel A fully parallel.
    row_tot = jnp.sum(f0_t, axis=2) * (-1.0 / float(sample_rate))   # (N, R_in)
    inc = jnp.cumsum(row_tot, axis=1)
    off_t = (inc - row_tot)[..., None].astype(jnp.float32)          # (N, R_in, 1)
    total = inc[:, -1]
    wrap = total - jnp.floor(total)                                 # sawtooth[L-1]
    wrap_t = jnp.broadcast_to(wrap[:, None, None].astype(jnp.float32), (N, 1, 128))

    i = jnp.arange(128, dtype=jnp.int32)
    triu = (i[:, None] <= i[None, :]).astype(jnp.bfloat16)          # within-row cumsum weights
    smat = _build_shift_mats(taps, D)                               # (D, 128, 128) bf16 FIR band

    imp_t = _impulse_pallas(f0_t, off_t, wrap_t, triu,
                            sample_rate=sample_rate, tile_rows=imp_tile_rows)
    src_t = _conv_mix_pallas(f0_t, noise_t, imp_t, smat,
                             min_frequency=min_frequency,
                             tile_rows=conv_tile_rows, out_rows=R_out)
    source = src_t.reshape(N, R_out * 128)[:, :L]
    impulse = imp_t.reshape(N, L_in)
    return source, impulse


# ---------------------------------------------------------------------------
# Plain-JAX glue matching the torch module (interpolation, FIR taps)
# ---------------------------------------------------------------------------
def linear_interpolate_ncl(x, scale):
    """F.interpolate(x, scale_factor=scale, mode='linear', align_corners=False)
    for x of shape (N, 1, F). Returns (N, F*scale)."""
    _, _, fin = x.shape
    lout = fin * scale
    i = jnp.arange(lout, dtype=jnp.float32)
    src = jnp.maximum((i + 0.5) / scale - 0.5, 0.0)
    i0 = jnp.minimum(jnp.floor(src).astype(jnp.int32), fin - 1)
    i1 = jnp.minimum(i0 + 1, fin - 1)
    w = src - i0.astype(jnp.float32)
    g = x[:, 0, :]
    return g[:, i0] * (1.0 - w) + g[:, i1] * w


def generate_fir_taps(key, kernel_size, base_frequency, beta, sample_rate):
    """Matches CyclicNoiseOscillator.generate_kernel (deterministic PRNG noise)."""
    t = jnp.arange(kernel_size, dtype=jnp.float32)
    decay = jnp.exp(-t * base_frequency / beta / sample_rate)
    decay = decay[::-1]
    noise = jax.random.normal(key, (kernel_size,), dtype=jnp.float32)
    return noise * decay


# ---------------------------------------------------------------------------
# Smoke test
# ---------------------------------------------------------------------------
if __name__ == "__main__":
    # Scaled-down oscillator config (same formulas; real defaults: frame_size=480, K=1003).
    sample_rate = 2400
    frame_size = 16
    min_frequency = 20.0
    base_frequency = 110.0
    beta = 0.78
    kernel_size = int(4.6 * sample_rate / base_frequency)   # = 100 FIR taps

    N, F_frames = 2, 64                                      # f0 input: (N, 1, F)
    key = jax.random.PRNGKey(0)
    k_f0, k_noise, k_ker = jax.random.split(key, 3)

    f0 = jax.random.uniform(k_f0, (N, 1, F_frames), minval=60.0, maxval=300.0,
                            dtype=jnp.float32)
    f0 = f0.at[:, :, 0:4].set(5.0)                           # guarantee an unvoiced stretch

    f0_up = linear_interpolate_ncl(f0, frame_size)           # (N, L), L = 1024
    L = f0_up.shape[1]
    noise = jax.random.normal(k_noise, (N, L), dtype=jnp.float32)
    taps = generate_fir_taps(k_ker, kernel_size, base_frequency, beta, sample_rate)

    source, impulse = cyclic_noise_source(
        f0_up, noise, taps, sample_rate=sample_rate, min_frequency=min_frequency,
        imp_tile_rows=8, conv_tile_rows=8)
    source = jax.block_until_ready(source)
    out_ncl = source[:, None, :]                             # (N, 1, L) torch NCL layout

    # structural checks
    assert out_ncl.shape == (N, 1, L)
    assert bool(jnp.all(jnp.isfinite(source)))

    voiced = f0_up >= min_frequency
    unvoiced = ~voiced
    assert bool(jnp.any(unvoiced))
    # unvoiced samples pass the Gaussian noise through bit-exactly (jnp.where mix)
    assert bool(jnp.all(jnp.where(unvoiced, source == noise, True)))

    # phase-increment sanity: away from wrap points, impulse[t] == -f0[t]/sr
    step_ok = jnp.abs(impulse[:, :L] + f0_up / sample_rate) < 1e-3
    assert float(jnp.mean(step_ok.astype(jnp.float32))) > 0.7

    # banded bf16 conv vs dense f32 reference on the kernel's own impulse train
    K = taps.shape[0]
    idx = jnp.arange(L)[:, None] + jnp.arange(K)[None, :]
    ref_conv = jnp.einsum('nlk,k->nl', impulse[:, idx], taps)
    num = jnp.linalg.norm(jnp.where(voiced, source - ref_conv, 0.0))
    den = jnp.linalg.norm(jnp.where(voiced, ref_conv, 0.0)) + 1e-6
    assert float(num / den) < 0.05

    print("KERNEL_OK")
</pallas_src>

<mosaic_0001>
module attributes {stable_mosaic.version = 11 : i64} {
  func.func @_impulse_kernel(%arg0: i32, %arg1: i32, %arg2: memref<1x8x128xf32, #tpu.memory_space<vmem>>, %arg3: memref<1x8x1xf32, #tpu.memory_space<vmem>>, %arg4: memref<1x1x128xf32, #tpu.memory_space<vmem>>, %arg5: memref<128x128xbf16, #tpu.memory_space<vmem>>, %arg6: memref<1x8x128xf32, #tpu.memory_space<vmem>>) attributes {dimension_semantics = [#tpu.dimension_semantics<parallel>, #tpu.dimension_semantics<parallel>], iteration_bounds = array<i64: 2, 2>, scalar_prefetch = 0 : i64, scratch_operands = 0 : i64, tpu.core_type = #tpu.core_type<tc>, window_params = [{transform_indices = @transform_0, window_bounds = array<i64: 1, 8, 128>}, {transform_indices = @transform_1, window_bounds = array<i64: 1, 8, 1>}, {transform_indices = @transform_2, window_bounds = array<i64: 1, 1, 128>}, {pipeline_mode = #tpu.pipeline_mode<synchronous>, transform_indices = @transform_3, window_bounds = array<i64: 128, 128>}, {transform_indices = @transform_4, window_bounds = array<i64: 1, 8, 128>}]} {
    %c0 = arith.constant 0 : index
    %c0_0 = arith.constant 0 : index
    %c0_1 = arith.constant 0 : index
    %0 = vector.load %arg2[%c0, %c0_0, %c0_1] : memref<1x8x128xf32, #tpu.memory_space<vmem>>, vector<1x8x128xf32>
    %1 = vector.shape_cast %0 : vector<1x8x128xf32> to vector<8x128xf32>
    %cst = arith.constant -4.16666677E-4 : f32
    %2 = vector.broadcast %cst : f32 to vector<8x128xf32>
    %3 = arith.mulf %1, %2 : vector<8x128xf32>
    %4 = arith.truncf %3 : vector<8x128xf32> to vector<8x128xbf16>
    %5 = arith.extf %4 : vector<8x128xbf16> to vector<8x128xf32>
    %6 = arith.subf %3, %5 : vector<8x128xf32>
    %7 = arith.truncf %6 : vector<8x128xf32> to vector<8x128xbf16>
    %c0_2 = arith.constant 0 : index
    %c0_3 = arith.constant 0 : index
    %8 = vector.load %arg5[%c0_2, %c0_3] : memref<128x128xbf16, #tpu.memory_space<vmem>>, vector<128x128xbf16>
    %cst_4 = arith.constant dense<0.000000e+00> : vector<8x128xf32>
    %9 = tpu.matmul %4, %8, %cst_4 {dimension_numbers = #tpu.dot_dimension_numbers<[1], [0], [0], [1], [0, 0, 1, 1], [], []>} : vector<8x128xbf16>, vector<128x128xbf16>, vector<8x128xf32> -> vector<8x128xf32>
    %cst_5 = arith.constant dense<0.000000e+00> : vector<8x128xf32>
    %10 = tpu.matmul %7, %8, %cst_5 {dimension_numbers = #tpu.dot_dimension_numbers<[1], [0], [0], [1], [0, 0, 1, 1], [], []>} : vector<8x128xbf16>, vector<128x128xbf16>, vector<8x128xf32> -> vector<8x128xf32>
    %11 = arith.addf %9, %10 : vector<8x128xf32>
    %c0_6 = arith.constant 0 : index
    %c0_7 = arith.constant 0 : index
    %c0_8 = arith.constant 0 : index
    %12 = vector.load %arg3[%c0_6, %c0_7, %c0_8] : memref<1x8x1xf32, #tpu.memory_space<vmem>>, vector<1x8x1xf32>
    %13 = vector.shape_cast %12 : vector<1x8x1xf32> to vector<8x1xf32>
    %14 = vector.broadcast %13 : vector<8x1xf32> to vector<8x128xf32>
    %15 = arith.addf %14, %11 : vector<8x128xf32>
    %16 = math.floor %15 : vector<8x128xf32>
    %17 = arith.subf %15, %16 : vector<8x128xf32>
    %18 = arith.subf %15, %3 : vector<8x128xf32>
    %19 = math.floor %18 : vector<8x128xf32>
    %20 = arith.subf %18, %19 : vector<8x128xf32>
    %21 = tpu.iota {dimensions = array<i32: 0>} : vector<8x128xi32>
    %22 = tpu.iota {dimensions = array<i32: 1>} : vector<8x128xi32>
    %c0_i32 = arith.constant 0 : i32
    %23 = arith.cmpi eq, %arg1, %c0_i32 : i32
    %c0_i32_9 = arith.constant 0 : i32
    %24 = vector.broadcast %c0_i32_9 : i32 to vector<8x128xi32>
    %25 = arith.cmpi eq, %21, %24 : vector<8x128xi32>
    %c0_i32_10 = arith.constant 0 : i32
    %26 = vector.broadcast %c0_i32_10 : i32 to vector<8x128xi32>
    %27 = arith.cmpi eq, %22, %26 : vector<8x128xi32>
    %28 = arith.andi %25, %27 : vector<8x128xi1>
    %29 = vector.broadcast %23 : i1 to vector<8x128xi1>
    %30 = arith.andi %29, %28 : vector<8x128xi1>
    %c0_11 = arith.constant 0 : index
    %c0_12 = arith.constant 0 : index
    %c0_13 = arith.constant 0 : index
    %31 = vector.load %arg4[%c0_11, %c0_12, %c0_13] : memref<1x1x128xf32, #tpu.memory_space<vmem>>, vector<1x1x128xf32>
    %32 = vector.shape_cast %31 : vector<1x1x128xf32> to vector<1x128xf32>
    %33 = vector.shape_cast %32 : vector<1x128xf32> to vector<1x128xf32>
    %34 = vector.broadcast %33 : vector<1x128xf32> to vector<8x128xf32>
    %35 = arith.select %30, %34, %20 : vector<8x128xi1>, vector<8x128xf32>
    %36 = arith.subf %17, %35 : vector<8x128xf32>
    %c0_14 = arith.constant 0 : index
    %c0_15 = arith.constant 0 : index
    %c0_16 = arith.constant 0 : index
    %37 = vector.load %arg6[%c0_14, %c0_15, %c0_16] : memref<1x8x128xf32, #tpu.memory_space<vmem>>, vector<1x8x128xf32>
    %38 = vector.shape_cast %37 : vector<1x8x128xf32> to vector<8x128xf32>
    %39 = vector.shape_cast %36 : vector<8x128xf32> to vector<1x8x128xf32>
    tpu.vector_store %arg6[%c0_14, %c0_15, %c0_16], %39 {strides = array<i32>} : memref<1x8x128xf32, #tpu.memory_space<vmem>>, vector<1x8x128xf32>,
    return
  }
  func.func @transform_0(%arg0: i32, %arg1: i32) -> (i32, i32, i32) {
    %c0_i32 = arith.constant 0 : i32
    %c0_i32_0 = arith.constant 0 : i32
    return %arg0, %arg1, %c0_i32 : i32, i32, i32
  }
  func.func @transform_1(%arg0: i32, %arg1: i32) -> (i32, i32, i32) {
    %c0_i32 = arith.constant 0 : i32
    %c0_i32_0 = arith.constant 0 : i32
    return %arg0, %arg1, %c0_i32 : i32, i32, i32
  }
  func.func @transform_2(%arg0: i32, %arg1: i32) -> (i32, i32, i32) {
    %c0_i32 = arith.constant 0 : i32
    %c0_i32_0 = arith.constant 0 : i32
    %c0_i32_1 = arith.constant 0 : i32
    return %arg0, %c0_i32, %c0_i32_0 : i32, i32, i32
  }
  func.func @transform_3(%arg0: i32, %arg1: i32) -> (i32, i32) {
    %c0_i32 = arith.constant 0 : i32
    %c0_i32_0 = arith.constant 0 : i32
    %c0_i32_1 = arith.constant 0 : i32
    return %c0_i32, %c0_i32_0 : i32, i32
  }
  func.func @transform_4(%arg0: i32, %arg1: i32) -> (i32, i32, i32) {
    %c0_i32 = arith.constant 0 : i32
    %c0_i32_0 = arith.constant 0 : i32
    return %arg0, %arg1, %c0_i32 : i32, i32, i32
  }
}

</mosaic_0001>

<llo_original>
// kernel: tpu_custom_call.1
$region0: #{tpu_custom_call.1}
  #allocation0 [shape = 'u32[]', space=smem, size = 0x4, offset = 0x4, fixed_abs, tag = 'smem constant byte address 0x4 - core index']
  #allocation1 [shape = 'u32[72,128]{1,0:T(1,128)}', space=vmem, size = 0x9000, scoped, tag = 'internal scratch']
  %s0 = inlined_call_operand.vmem [shape: f32[2,16,128], index: 0, kind: input, shape index: {}]
  %s1 = inlined_call_operand.vmem [shape: f32[2,16,1], index: 1, kind: input, shape index: {}]
  %s2 = inlined_call_operand.vmem [shape: f32[2,1,128], index: 2, kind: input, shape index: {}]
  %s3 = inlined_call_operand.hbm [shape: bf16[128,128], index: 3, kind: input, shape index: {}]
  %s4 = inlined_call_operand.hbm [shape: f32[2,16,128], index: 4, kind: output, shape index: {}]
  %s5 = sld [smem:[#allocation0]]
  $region53: #{tpu_custom_call.1} parent=0
    _
  %s7 = ssub.s32 1, %s5
  %s8 = scalar_select 0, %s7, %s5
  $region1: #{tpu_custom_call.1} parent=0
    #allocation2 [shape = 'u8[32768]{0}', space=vmem, size = 0x8000, scoped, tag = 'input window, operand 3, single buffered']
    #allocation3 [shape = 's32[2]{0}', space=sflag, size = 0x8, scoped, tag = 'scoped memory for tpu_custom_call.1']
    #allocation4 [shape = 's32[2]{0}', space=sflag, size = 0x8, scoped, tag = 'scoped memory for tpu_custom_call.1']
    #allocation5 [shape = 'u8[8192]{0}', space=vmem, size = 0x2000, scoped, tag = 'output window, operand 0']
    %9 = vsyncpa [#allocation3], 0
    %10 = vsyncpa [#allocation4], 0
    %s11 = scalar_lea.sflag [#allocation4], 1
    %12 = vsyncpa %s11, 0
    loop: start=0, step=1, limit=6
    $region2: #{tpu_custom_call.1} parent=1 // loop_pre_header
      _
    $region3: #{tpu_custom_call.1} parent=1 // loop_header
      %s14 = sphi 0, %s18
      %p15 = scmp.ge.s32.totalorder %s14, 6
      %s21 = sphi 0, %s33
      %s22 = sphi 0, %s29
      %s23 = sphi 0, %s21
      %s24 = sphi 0, %s22
      %s25 = sphi 0, %s23
      %s26 = sphi 0, %s24
      %s38 = sphi 0, %s40
      %s41 = sphi 0, %s38
      %s42 = sphi 0, %s41
      %s58 = sphi 0, %s42
      %s66 = sphi 0, %s68
      %s69 = sphi 0, %s66
      %s70 = sphi 0, %s69
      %s86 = sphi 0, %s70
      %s92 = sphi 0, %s94
      %s95 = sphi 0, %s92
      %s96 = sphi 0, %s95
      %s112 = sphi 0, %s96
      %s116 = sphi 0, %s116
      %s118 = sphi 0, %s116
      %s119 = sphi 0, %s118
      %s133 = sphi 0, %s119
      %s141 = sphi 0, %s143
      %s144 = sphi 0, %s141
      %s145 = sphi 0, %s144
      %s161 = sphi 0, %s145
    $region4: #{tpu_custom_call.1} parent=1 // loop_header_branch
      %17 = sbr.rel (%p15) target = $region8
    $region5: #{tpu_custom_call.1} parent=1 // loop_body
      %s19 = ssub.s32 %s14, 1
      %s20 = ssub.s32 %s14, 2
      %s27 = sadd.s32 1, %s22
      %p28 = scmp.ge.s32.totalorder %s27, 2
      %s29 = scalar_select %p28, 0, %s27
      %s30 = sadd.s32 1, %s21
      %s31 = scalar_select %p28, %s30, %s21
      %p32 = scmp.ge.s32.totalorder %s31, 2
      %s33 = scalar_select %p32, 0, %s31
      %s34 = ssub.s32 %s21, %s33
      %s35 = ssub.s32 %s22, %s29
      %s36 = sor.u32 %s34, %s35
      %p37 = scmp.eq.s32.totalorder %s36, 0
      %s39 = sadd.s32 %s38, 1
      %s40 = scalar_select %p37, %s38, %s39
      %p43 = pneg %p37
      %p44 = scmp.eq.s32.totalorder %s14, 3
      %p45 = por %p43, %p44
      %p46 = scmp.ne.s32.totalorder %s38, %s41
      %p47 = scmp.eq.s32.totalorder %s14, 0
      %p48 = por %p46, %p47
      %p49 = scmp.ne.s32.totalorder %s38, %s41
      %p50 = scmp.eq.s32.totalorder %s19, 3
      %p51 = por %p49, %p50
      %p52 = scmp.ne.s32.totalorder %s41, %s42
      %p53 = scmp.eq.s32.totalorder %s19, 0
      %p54 = por %p52, %p53
      %p55 = scmp.ne.s32.totalorder %s41, %s42
      %p56 = scmp.eq.s32.totalorder %s20, 3
      %p57 = por %p55, %p56
      %p59 = scmp.ne.s32.totalorder %s42, %s58
      %p60 = scmp.eq.s32.totalorder %s20, 0
      %p61 = por %p59, %p60
      %s62 = ssub.s32 %s21, %s33
      %s63 = ssub.s32 %s22, %s29
      %s64 = sor.u32 %s62, %s63
      %p65 = scmp.eq.s32.totalorder %s64, 0
      %s67 = sadd.s32 %s66, 1
      %s68 = scalar_select %p65, %s66, %s67
      %p71 = pneg %p65
      %p72 = scmp.eq.s32.totalorder %s14, 3
      %p73 = por %p71, %p72
      %p74 = scmp.ne.s32.totalorder %s66, %s69
      %p75 = scmp.eq.s32.totalorder %s14, 0
      %p76 = por %p74, %p75
      %p77 = scmp.ne.s32.totalorder %s66, %s69
      %p78 = scmp.eq.s32.totalorder %s19, 3
      %p79 = por %p77, %p78
      %p80 = scmp.ne.s32.totalorder %s69, %s70
      %p81 = scmp.eq.s32.totalorder %s19, 0
      %p82 = por %p80, %p81
      %p83 = scmp.ne.s32.totalorder %s69, %s70
      %p84 = scmp.eq.s32.totalorder %s20, 3
      %p85 = por %p83, %p84
      %p87 = scmp.ne.s32.totalorder %s70, %s86
      %p88 = scmp.eq.s32.totalorder %s20, 0
      %p89 = por %p87, %p88
      %s90 = ssub.s32 %s21, %s33
      %p91 = scmp.eq.s32.totalorder %s90, 0
      %s93 = sadd.s32 %s92, 1
      %s94 = scalar_select %p91, %s92, %s93
      %p97 = pneg %p91
      %p98 = scmp.eq.s32.totalorder %s14, 3
      %p99 = por %p97, %p98
      %p100 = scmp.ne.s32.totalorder %s92, %s95
      %p101 = scmp.eq.s32.totalorder %s14, 0
      %p102 = por %p100, %p101
      %p103 = scmp.ne.s32.totalorder %s92, %s95
      %p104 = scmp.eq.s32.totalorder %s19, 3
      %p105 = por %p103, %p104
      %p106 = scmp.ne.s32.totalorder %s95, %s96
      %p107 = scmp.eq.s32.totalorder %s19, 0
      %p108 = por %p106, %p107
      %p109 = scmp.ne.s32.totalorder %s95, %s96
      %p110 = scmp.eq.s32.totalorder %s20, 3
      %p111 = por %p109, %p110
      %p113 = scmp.ne.s32.totalorder %s96, %s112
      %p114 = scmp.eq.s32.totalorder %s20, 0
      %p115 = por %p113, %p114
      %s117 = sadd.s32 %s116, 1
      %p120 = scmp.eq.s32.totalorder %s14, 3
      %p121 = scmp.ne.s32.totalorder %s116, %s118
      %p122 = scmp.eq.s32.totalorder %s14, 0
      %p123 = por %p121, %p122
      %p124 = scmp.ne.s32.totalorder %s116, %s118
      %p125 = scmp.eq.s32.totalorder %s19, 3
      %p126 = por %p124, %p125
      %p127 = scmp.ne.s32.totalorder %s118, %s119
      %p128 = scmp.eq.s32.totalorder %s19, 0
      %p129 = por %p127, %p128
      %p130 = scmp.ne.s32.totalorder %s118, %s119
      %p131 = scmp.eq.s32.totalorder %s20, 3
      %p132 = por %p130, %p131
      %p134 = scmp.ne.s32.totalorder %s119, %s133
      %p135 = scmp.eq.s32.totalorder %s20, 0
      %p136 = por %p134, %p135
      %s137 = ssub.s32 %s21, %s33
      %s138 = ssub.s32 %s22, %s29
      %s139 = sor.u32 %s137, %s138
      %p140 = scmp.eq.s32.totalorder %s139, 0
      %s142 = sadd.s32 %s141, 1
      %s143 = scalar_select %p140, %s141, %s142
      %p146 = pneg %p140
      %p147 = scmp.eq.s32.totalorder %s14, 3
      %p148 = por %p146, %p147
      %p149 = scmp.ne.s32.totalorder %s141, %s144
      %p150 = scmp.eq.s32.totalorder %s14, 0
      %p151 = por %p149, %p150
      %p152 = scmp.ne.s32.totalorder %s141, %s144
      %p153 = scmp.eq.s32.totalorder %s19, 3
      %p154 = por %p152, %p153
      %p155 = scmp.ne.s32.totalorder %s144, %s145
      %p156 = scmp.eq.s32.totalorder %s19, 0
      %p157 = por %p155, %p156
      %p158 = scmp.ne.s32.totalorder %s144, %s145
      %p159 = scmp.eq.s32.totalorder %s20, 3
      %p160 = por %p158, %p159
      %p162 = scmp.ne.s32.totalorder %s145, %s161
      %p163 = scmp.eq.s32.totalorder %s20, 0
      %p164 = por %p162, %p163
      %p165 = scmp.le.s32.totalorder 1, %s14
      %p166 = scmp.lt.s32.totalorder %s14, 5
      %p167 = pnand %p165, %p166
      %p168 = pneg %p167
      // Predicated region
      $region9: #{tpu_custom_call.1} parent=5 // pred_check
        _
      $region10: #{tpu_custom_call.1} parent=5 // pred_check_branch
        %170 = sbr.rel (%p167) target = $region12
      $region11: #{tpu_custom_call.1} parent=5 // pred_region
        %s171 = ssub.s32 %s14, 1
        // Predicated region
        $region13: #{tpu_custom_call.1} parent=11 // pred_check
          %p172 = pneg %p129
        $region14: #{tpu_custom_call.1} parent=11 // pred_check_branch
          %174 = sbr.rel (%p172) target = $region16
        $region15: #{tpu_custom_call.1} parent=11 // pred_region
          %176 = vsyncadd [#allocation3], 0
          %s177 = sshll.u32 %s3, 4
          %s178 = int_to_ptr.hbm [resolvable:$true] %s177
          %s179 = sshll.u32 [#allocation2], 4
          %s180 = int_to_ptr.vmem [resolvable:$true] %s179
          %185 = dma.hbm_to_vmem [thread:$0]  %s178, 1024, %s180, [#allocation3], 64, 64, 4
        $region16: #{tpu_custom_call.1} parent=11 // pred_fallthru
          _
      $region12: #{tpu_custom_call.1} parent=5 // pred_fallthru
        _
      %p186 = scmp.lt.s32.totalorder %s14, 4
      // Predicated region
      $region17: #{tpu_custom_call.1} parent=5 // pred_check
        %p187 = pneg %p186
      $region18: #{tpu_custom_call.1} parent=5 // pred_check_branch
        %189 = sbr.rel (%p187) target = $region20
      $region19: #{tpu_custom_call.1} parent=5 // pred_region
        // Predicated region
        $region21: #{tpu_custom_call.1} parent=19 // pred_check
          %p190 = pneg %p48
        $region22: #{tpu_custom_call.1} parent=19 // pred_check_branch
          %192 = sbr.rel (%p190) target = $region24
        $region23: #{tpu_custom_call.1} parent=19 // pred_region
          %p193 = scmp.lt.s32.totalorder %s21, 1
          %s194 = scalar_select %p193, %s21, 1
          %p195 = scmp.lt.s32.totalorder %s22, 1
          %s196 = scalar_select %p195, %s22, 1
          %s197 = smul.addr %s194, 2
          %s198 = sadd.s32 %s196, %s197
          %s199 = smul.addr %s198, 8
          %s200 = scalar_lea.vmem %s0, %s199
        $region24: #{tpu_custom_call.1} parent=19 // pred_fallthru
          _
        // Predicated region
        $region25: #{tpu_custom_call.1} parent=19 // pred_check
          %p201 = pneg %p76
        $region26: #{tpu_custom_call.1} parent=19 // pred_check_branch
          %203 = sbr.rel (%p201) target = $region28
        $region27: #{tpu_custom_call.1} parent=19 // pred_region
          %p204 = scmp.lt.s32.totalorder %s21, 1
          %s205 = scalar_select %p204, %s21, 1
          %p206 = scmp.lt.s32.totalorder %s22, 1
          %s207 = scalar_select %p206, %s22, 1
          %s208 = smul.addr %s205, 2
          %s209 = sadd.s32 %s207, %s208
          %s210 = smul.addr %s209, 8
          %s211 = scalar_lea.vmem %s1, %s210
        $region28: #{tpu_custom_call.1} parent=19 // pred_fallthru
          _
        // Predicated region
        $region29: #{tpu_custom_call.1} parent=19 // pred_check
          %p212 = pneg %p102
        $region30: #{tpu_custom_call.1} parent=19 // pred_check_branch
          %214 = sbr.rel (%p212) target = $region32
        $region31: #{tpu_custom_call.1} parent=19 // pred_region
          %p215 = scmp.lt.s32.totalorder %s21, 1
          %s216 = scalar_select %p215, %s21, 1
          %s217 = scalar_lea.vmem %s2, %s216
        $region32: #{tpu_custom_call.1} parent=19 // pred_fallthru
          _
      $region20: #{tpu_custom_call.1} parent=5 // pred_fallthru
        _
      %p218 = scmp.le.s32.totalorder 1, %s14
      %p219 = scmp.lt.s32.totalorder %s14, 5
      %p220 = pnand %p218, %p219
      %p221 = pneg %p220
      // Predicated region
      $region33: #{tpu_custom_call.1} parent=5 // pred_check
        _
      $region34: #{tpu_custom_call.1} parent=5 // pred_check_branch
        %223 = sbr.rel (%p220) target = $region36
      $region35: #{tpu_custom_call.1} parent=5 // pred_region
        %s224 = ssub.s32 %s14, 1
        // Predicated region
        $region37: #{tpu_custom_call.1} parent=35 // pred_check
          %p225 = pneg %p129
        $region38: #{tpu_custom_call.1} parent=35 // pred_check_branch
          %227 = sbr.rel (%p225) target = $region40
        $region39: #{tpu_custom_call.1} parent=35 // pred_region
          %229 = dma.done [#allocation3], 1024
        $region40: #{tpu_custom_call.1} parent=35 // pred_fallthru
          _
        %p230 = scmp.lt.s32.totalorder %s23, 1
        %s231 = scalar_select %p230, %s23, 1
        %p232 = scmp.lt.s32.totalorder %s24, 1
        %s233 = scalar_select %p232, %s24, 1
        %s234 = smul.addr %s231, 2
        %s235 = sadd.s32 %s233, %s234
        %s236 = smul.addr %s235, 8
        %s237 = scalar_lea.vmem %s0, %s236
        %p238 = pneg %p54
        %p239 = pneg %p51
        %p240 = scmp.lt.s32.totalorder %s23, 1
        %s241 = scalar_select %p240, %s23, 1
        %p242 = scmp.lt.s32.totalorder %s24, 1
        %s243 = scalar_select %p242, %s24, 1
        %s244 = smul.addr %s241, 2
        %s245 = sadd.s32 %s243, %s244
        %s246 = smul.addr %s245, 8
        %s247 = scalar_lea.vmem %s1, %s246
        %p248 = pneg %p82
        %p249 = pneg %p79
        %p250 = scmp.lt.s32.totalorder %s23, 1
        %s251 = scalar_select %p250, %s23, 1
        %s252 = scalar_lea.vmem %s2, %s251
        %p253 = pneg %p108
        %p254 = pneg %p105
        %p255 = pneg %p129
        %p256 = pneg %p126
        %p257 = pneg %p157
        %p258 = pneg %p154
        %s259 = sand.u32 %s144, 1
        %s260 = scalar_lea.sflag [#allocation4], %s259
        %s261 = sand.u32 %s144, 1
        %s262 = smul.addr %s261, 8
        %s263 = scalar_lea.vmem [#allocation5], %s262
        %p264 = scmp.lt.s32.totalorder %s23, 1
        %s265 = scalar_select %p264, %s23, 1
        %p266 = scmp.lt.s32.totalorder %s24, 1
        %s267 = scalar_select %p266, %s24, 1
        %s268 = smul.addr %s265, 2
        %s269 = sadd.s32 %s267, %s268
        %s270 = smul.addr %s269, 8
        %s271 = scalar_lea.vmem %s0, %s270
        %p272 = scmp.lt.s32.totalorder %s23, 1
        %s273 = scalar_select %p272, %s23, 1
        %p274 = scmp.lt.s32.totalorder %s24, 1
        %s275 = scalar_select %p274, %s24, 1
        %s276 = smul.addr %s273, 2
        %s277 = sadd.s32 %s275, %s276
        %s278 = smul.addr %s277, 8
        %s279 = scalar_lea.vmem %s1, %s278
        %p280 = scmp.lt.s32.totalorder %s23, 1
        %s281 = scalar_select %p280, %s23, 1
        %s282 = scalar_lea.vmem %s2, %s281
        %v283 = vld [vmem:[%s271] sm:$0xff]
        %v284 = vmul.f32 %v283, -0.00041666668
        %v285 = vpack.c.bf16 %v284, %v284
        %v286 = vunpack.c.l.bf16 %v285
        %v287 = vsub.f32 %v284, %v286
        %v288 = vpack.c.bf16 %v287, %v287
        %v289 = vld [vmem:[#allocation2] sm:$0xf]
        %v290 = vld [vmem:[#allocation2 + $0x4] sm:$0xf]
        %v291 = vld [vmem:[#allocation2 + $0x8] sm:$0xf]
        %v292 = vld [vmem:[#allocation2 + $0xc] sm:$0xf]
        %v293 = vld [vmem:[#allocation2 + $0x10] sm:$0xf]
        %v294 = vld [vmem:[#allocation2 + $0x14] sm:$0xf]
        %v295 = vld [vmem:[#allocation2 + $0x18] sm:$0xf]
        %v296 = vld [vmem:[#allocation2 + $0x1c] sm:$0xf]
        %v297 = vld [vmem:[#allocation2 + $0x20] sm:$0xf]
        %v298 = vld [vmem:[#allocation2 + $0x24] sm:$0xf]
        %v299 = vld [vmem:[#allocation2 + $0x28] sm:$0xf]
        %v300 = vld [vmem:[#allocation2 + $0x2c] sm:$0xf]
        %v301 = vld [vmem:[#allocation2 + $0x30] sm:$0xf]
        %v302 = vld [vmem:[#allocation2 + $0x34] sm:$0xf]
        %v303 = vld [vmem:[#allocation2 + $0x38] sm:$0xf]
        %v304 = vld [vmem:[#allocation2 + $0x3c] sm:$0xf]
        %v321 = vunpack.c.l.b16 %v289
        %v322 = vunpack.c.l.b16 %v290
        %v323 = vunpack.c.l.b16 %v291
        %v324 = vunpack.c.l.b16 %v292
        %v325 = vunpack.c.l.b16 %v293
        %v326 = vunpack.c.l.b16 %v294
        %v327 = vunpack.c.l.b16 %v295
        %v328 = vunpack.c.l.b16 %v296
        %v329 = vunpack.c.l.b16 %v297
        %v330 = vunpack.c.l.b16 %v298
        %v331 = vunpack.c.l.b16 %v299
        %v332 = vunpack.c.l.b16 %v300
        %v333 = vunpack.c.l.b16 %v301
        %v334 = vunpack.c.l.b16 %v302
        %v335 = vunpack.c.l.b16 %v303
        %v336 = vunpack.c.l.b16 %v304
        %v337 = vpack.c.b16 %v322, %v321
        %v338 = vpack.c.b16 %v324, %v323
        %v339 = vpack.c.b16 %v326, %v325
        %v340 = vpack.c.b16 %v328, %v327
        %v341 = vpack.c.b16 %v330, %v329
        %v342 = vpack.c.b16 %v332, %v331
        %v343 = vpack.c.b16 %v334, %v333
        %v344 = vpack.c.b16 %v336, %v335
        %353 = vmatpush.bf16.msra.mxu0 %v344
        %354 = vmatpush.bf16.msra.mxu0 %v343
        %355 = vmatpush.bf16.msra.mxu0 %v342
        %356 = vmatpush.bf16.msra.mxu0 %v341
        %357 = vmatpush.bf16.msra.mxu0 %v340
        %358 = vmatpush.bf16.msra.mxu0 %v339
        %359 = vmatpush.bf16.msra.mxu0 %v338
        %360 = vmatpush.bf16.msra.mxu0 %v337
        %361 = vmatmul.bf16.gmra.mxu0 %v288
        %v362 = vpop.f32.mrf.mxu0
        %v363 = vadd.f32 0.0, %v362
        %v364 = vpop.f32.mrf.mxu0
        %365 = vdwg.mxu0
        %366 = vmatpush.bf16.msra.mxu0 %v344
        %367 = vmatpush.bf16.msra.mxu0 %v343
        %368 = vmatpush.bf16.msra.mxu0 %v342
        %369 = vmatpush.bf16.msra.mxu0 %v341
        %370 = vmatpush.bf16.msra.mxu0 %v340
        %371 = vmatpush.bf16.msra.mxu0 %v339
        %372 = vmatpush.bf16.msra.mxu0 %v338
        %373 = vmatpush.bf16.msra.mxu0 %v337
        %374 = vmatmul.bf16.gmra.mxu0 %v285
        %v375 = vpop.f32.mrf.mxu0
        %v376 = vadd.f32 %v363, %v375
        %v377 = vpop.f32.mrf.mxu0
        %378 = vdwg.mxu0
        %v379 = vld [vmem:[%s279] sm:$0xff]
        %381 = vset.pattern.permute.xlu0 0
        %382 = vperm.xlu0 %381, %v379
        %v383 = vpop.permute.xlu0 %382
        %v385 = vadd.f32 %v383, %v376
        %v386 = vfloor.f32 %v385
        %v387 = vsub.f32 %v385, %v386
        %v388 = vsub.f32 %v385, %v284
        %v389 = vfloor.f32 %v388
        %v390 = vsub.f32 %v388, %v389
        %v391 = vlaneseq
        %v392 = vshrl.u32 %v391, 7
        %v393 = vlaneseq
        %v394 = vand.u32 %v393, 127
        %p395 = scmp.eq.s32.totalorder %s24, 0
        %vm396 = vcmp.eq.s32.totalorder %v392, 0
        %vm397 = vcmp.eq.s32.totalorder %v394, 0
        %vm398 = vmand %vm396, %vm397
        %s399 = scalar_select %p395, 1, 0
        %v400 = vstv %s399
        %vm401 = vcmp.eq.s32.totalorder %v400, 1
        %vm402 = vmand %vm401, %vm398
        %v403 = vld [vmem:[%s282] sm:$0x1]
        %v405 = vperm.slane %v403, 0
        %v407 = vsel %vm402, %v405, %v390
        %v408 = vsub.f32 %v387, %v407
        %409 = vst [vmem:[%s263] sm:$0xff] %v408
        %s410 = sand.u32 %s144, 1
        %s411 = scalar_lea.sflag [#allocation4], %s410
        %s412 = sand.u32 %s144, 1
        %s413 = smul.addr %s412, 8
        %s414 = scalar_lea.vmem [#allocation5], %s413
        // Predicated region
        $region41: #{tpu_custom_call.1} parent=35 // pred_check
          %p415 = pneg %p154
        $region42: #{tpu_custom_call.1} parent=35 // pred_check_branch
          %417 = sbr.rel (%p415) target = $region44
        $region43: #{tpu_custom_call.1} parent=35 // pred_region
          %419 = vsyncadd %s411, 0
          %s420 = smul.addr %s23, 2
          %s421 = sadd.s32 %s24, %s420
          %s422 = smul.addr %s421, 8
          %s423 = scalar_lea.hbm %s4, %s422
          %s425 = sshll.u32 %s414, 4
          %s426 = int_to_ptr.vmem [resolvable:$true] %s425
          %s427 = sshll.u32 %s423, 4
          %s428 = int_to_ptr.hbm [resolvable:$true] %s427
          %430 = dma.vmem_to_hbm [thread:$0]  %s426, 128, %s428, %s411
        $region44: #{tpu_custom_call.1} parent=35 // pred_fallthru
          _
      $region36: #{tpu_custom_call.1} parent=5 // pred_fallthru
        _
      %p431 = scmp.le.s32.totalorder 2, %s14
      // Predicated region
      $region45: #{tpu_custom_call.1} parent=5 // pred_check
        %p432 = pneg %p431
      $region46: #{tpu_custom_call.1} parent=5 // pred_check_branch
        %434 = sbr.rel (%p432) target = $region48
      $region47: #{tpu_custom_call.1} parent=5 // pred_region
        %s435 = ssub.s32 %s14, 2
        // Predicated region
        $region49: #{tpu_custom_call.1} parent=47 // pred_check
          %p436 = pneg %p160
        $region50: #{tpu_custom_call.1} parent=47 // pred_check_branch
          %438 = sbr.rel (%p436) target = $region52
        $region51: #{tpu_custom_call.1} parent=47 // pred_region
          %s439 = sand.u32 %s145, 1
          %s440 = scalar_lea.sflag [#allocation4], %s439
          %s441 = sand.u32 %s145, 1
          %s442 = smul.addr %s441, 8
          %s443 = scalar_lea.vmem [#allocation5], %s442
          %445 = dma.done %s440, 128
        $region52: #{tpu_custom_call.1} parent=47 // pred_fallthru
          _
      $region48: #{tpu_custom_call.1} parent=5 // pred_fallthru
        _
    $region6: #{tpu_custom_call.1} parent=1 // loop_footer
      %s18 = sadd.s32 1, %s14
    $region7: #{tpu_custom_call.1} parent=1 // loop_footer_branch
      %13 = sbr.rel target = $region3
    $region8: #{tpu_custom_call.1} parent=1 // loop_exit
      _
    %446 = vsyncpa [#allocation3], 1
    %s447 = scalar_lea.sflag [#allocation3], 1
    %448 = vsyncpa %s447, 1
    %449 = vsyncpa [#allocation4], 1
    %s450 = scalar_lea.sflag [#allocation4], 1
    %451 = vsyncpa %s450, 1

</llo_original>
